<compile_context>
chip_gen: v7x
topology: tpu7x:2x2x1
jax: 0.10.0
libtpu: 0.0.40
codegen_flags: <defaults>
</compile_context>

<pallas_src>
import functools

import jax
import jax.numpy as jnp
import numpy as np
from jax.experimental import pallas as pl
from jax.experimental.pallas import tpu as pltpu


def _sweep_kernel(col_ref, w_ref, b_ref, out_ref, state_ref, *, matmul_dtype):
    """One directional-sweep step: state' = ReLU(state @ W + b) + col.

    The innermost grid axis walks the width dimension in sweep order (the
    direction lives entirely in the BlockSpec index_map), so the same body
    serves both the left->right and the right->left pass.

    col_ref:   (nh_tile, C)  residual column for this step (VMEM)
    w_ref:     (C, C)        effective weight, (C_in, C_out), matmul dtype
    b_ref:     (1, C)        conv bias (fp32)
    out_ref:   (nh_tile, C)  this step's output column
    state_ref: (nh_tile, C)  fp32 recurrence carry for the current row block
    """
    step = pl.program_id(1)
    col = col_ref[...].astype(jnp.float32)

    @pl.when(step == 0)
    def _():
        # First column of the sweep: pass-through (s_0 = x_0 / t_{W-1} = s_{W-1}).
        state_ref[...] = col

    @pl.when(step > 0)
    def _():
        prev = state_ref[...]
        lhs = prev if matmul_dtype is None else prev.astype(matmul_dtype)
        conv = jnp.dot(lhs, w_ref[...], preferred_element_type=jnp.float32)
        state_ref[...] = jnp.maximum(conv + b_ref[...], 0.0) + col
        # TODO(synk): split nh_tile into two row sub-blocks and interleave
        # matmul(A) with the bias/ReLU/add epilogue of B to hide the VPU
        # epilogue under the MXU on this serial width recurrence.

    out_ref[...] = state_ref[...].astype(out_ref.dtype)


def _round_up(x, m):
    return ((x + m - 1) // m) * m


def _vmem_budget():
    """(tile-sizing budget, vmem_limit_bytes) per TPU generation.

    v5e/v6e have 128 MiB physical VMEM, v7x has 64 MiB; the 16/32 MiB scoped
    defaults would needlessly throttle the row tile on every generation."""
    phys = None
    try:
        phys = getattr(pltpu.get_tpu_info(), "vmem_capacity_bytes", None)
    except Exception:
        phys = None
    if not phys:
        phys = 64 * 1024 * 1024          # conservative fallback: assume v7x
    return int(phys * 0.65), int(phys * 0.80)


def _choose_row_tile(nh, c, x_itemsize, w_itemsize, budget_bytes, num_cores=2):
    """Rows of N*H processed per block of one directional sweep.

    Pipelined VMEM per block: 2x input column + 2x output column (double
    buffered (tile, C) slabs) + one fp32 (tile, C) carry, plus the
    single-buffered weight/bias.  One sweep's in/out dtypes are (x-dtype,
    fp32) and the other's (fp32, x-dtype), so one model covers both calls.
    """
    per_row = (2 * x_itemsize + 2 * 4 + 4) * c
    fixed = w_itemsize * c * c + 4 * c            # Buffered(1) weight + bias
    budget_rows = max((budget_bytes - fixed) // per_row, 8)

    # Keep >= num_cores row blocks so the "parallel" axis can feed megacore.
    share = _round_up(max(-(-nh // num_cores), 8), 8)
    limit = min(int(budget_rows), share)

    # The 256x256 MXU (v6e/v7x) streams best with M >= 256; keep 8-row
    # granularity below that.
    gran = 256 if limit >= 256 else 8
    return max((limit // gran) * gran, 8)


def _invariant_spec(block_shape, index_map):
    """BlockSpec for a grid-invariant operand: single-buffered (no point
    double-buffering a block whose index_map is constant); falls back to a
    plain BlockSpec if this Pallas build lacks pipeline_mode."""
    try:
        return pl.BlockSpec(block_shape, index_map,
                            pipeline_mode=pl.Buffered(buffer_count=1))
    except TypeError:
        return pl.BlockSpec(block_shape, index_map)


def conv_lr_forward(fea, conv_weight, conv_bias, *, matmul_dtype=jnp.bfloat16):
    """convLR forward.  fea: (N, C, H, W), NCHW like PyTorch.

    matmul_dtype: MXU operand dtype (accumulation is always fp32).  bf16
    default gives ~3x MXU throughput on v5e/v6e/v7x and halves weight
    DMA/VMEM; pass None for full-fp32 operands."""
    n, c, h, w = fea.shape
    c_out, c_in, kh, kw = conv_weight.shape
    assert c_out == c and c_in == c
    # The center-tap collapse is only valid for the module's configuration:
    # width-1 column input, 1-row odd-width kernel, padding = (kw - 1) // 2.
    assert kh == 1 and kw % 2 == 1, "convLR collapse requires a (1, odd) kernel"

    w_eff_t = jnp.transpose(conv_weight[:, :, 0, (kw - 1) // 2])  # (C_in, C_out)
    if matmul_dtype is not None:
        w_eff_t = w_eff_t.astype(matmul_dtype)    # host-side cast (half the DMA)
    bias_row = conv_bias.reshape(1, c).astype(jnp.float32)

    # NCHW -> (W, N*H, C): channels on the 128-lane axis, rows on sublanes.
    x = jnp.transpose(fea, (3, 0, 2, 1)).reshape(w, n * h, c)

    nh = n * h
    budget, vmem_limit = _vmem_budget()
    nh_tile = _choose_row_tile(nh, c, fea.dtype.itemsize,
                               w_eff_t.dtype.itemsize, budget)
    nh_pad = _round_up(nh, nh_tile)
    if nh_pad != nh:
        x = jnp.pad(x, ((0, 0), (0, nh_pad - nh), (0, 0)))

    grid = (nh_pad // nh_tile, w)
    w_spec = _invariant_spec((c, c), lambda r, i: (0, 0))
    b_spec = _invariant_spec((1, c), lambda r, i: (0, 0))
    fwd_col = pl.BlockSpec((None, nh_tile, c), lambda r, i: (i, r, 0))
    bwd_col = pl.BlockSpec((None, nh_tile, c), lambda r, j: (w - 1 - j, r, 0))

    compiler_params = pltpu.CompilerParams(
        dimension_semantics=("parallel", "arbitrary"),
        vmem_limit_bytes=vmem_limit)
    kernel = functools.partial(_sweep_kernel, matmul_dtype=matmul_dtype)
    scratch = [pltpu.VMEM((nh_tile, c), jnp.float32)]

    # Pass 1 (left -> right): s_i = ReLU(W s_{i-1} + b) + x_i ; s_0 = x_0.
    # The intermediate stays fp32 in HBM regardless of the I/O dtype.
    s = pl.pallas_call(
        kernel,
        out_shape=jax.ShapeDtypeStruct((w, nh_pad, c), jnp.float32),
        grid_spec=pltpu.PrefetchScalarGridSpec(
            num_scalar_prefetch=0, grid=grid,
            in_specs=[fwd_col, w_spec, b_spec],
            out_specs=fwd_col,
            scratch_shapes=scratch),
        compiler_params=compiler_params,
    )(x, w_eff_t, bias_row)

    # Pass 2 (right -> left): t_p = ReLU(W t_{p+1} + b) + s_p ; t_{W-1} = s_{W-1}.
    out = pl.pallas_call(
        kernel,
        out_shape=jax.ShapeDtypeStruct((w, nh_pad, c), fea.dtype),
        grid_spec=pltpu.PrefetchScalarGridSpec(
            num_scalar_prefetch=0, grid=grid,
            in_specs=[bwd_col, w_spec, b_spec],
            out_specs=bwd_col,
            scratch_shapes=scratch),
        compiler_params=compiler_params,
    )(s, w_eff_t, bias_row)

    out = out[:, :nh, :]
    # (W, N*H, C) -> NCHW.
    return jnp.transpose(out.reshape(w, n, h, c), (1, 3, 2, 0))


def conv_lr_reference(fea, conv_weight, conv_bias):
    """Plain-JAX reference mirroring the PyTorch loop structure (accurate f32)."""
    n, c, h, w = fea.shape
    kw = conv_weight.shape[-1]
    w_eff = conv_weight[:, :, 0, (kw - 1) // 2]

    def conv1(col):  # col: (n, c, h)
        y = jnp.einsum('oc,nch->noh', w_eff, col,
                       precision=jax.lax.Precision.HIGHEST)
        y = y + conv_bias[None, :, None]
        return jnp.maximum(y, 0.0)

    stack = [fea[:, :, :, 0]]
    for i in range(1, w):
        stack.append(conv1(stack[i - 1]) + fea[:, :, :, i])
    for i in range(w):
        pos = w - 1 - i
        if pos == w - 1:
            continue
        stack[pos] = conv1(stack[pos + 1]) + stack[pos]
    return jnp.stack(stack, axis=3)


if __name__ == "__main__":
    key = jax.random.PRNGKey(0)
    # Small but shape-consistent with the module; C=128 keeps the lane axis
    # dense (production in_out_channels=2048).
    N, C, H, W = 2, 128, 8, 16
    k1, k2, k3 = jax.random.split(key, 3)

    fea = jax.random.normal(k1, (N, C, H, W), dtype=jnp.float32)
    # nn.Conv2d(C, C, (1, 9)) parameters, deterministically initialized.
    conv_weight = jax.random.normal(k2, (C, C, 1, 9), dtype=jnp.float32) * 0.02
    conv_bias = jax.random.normal(k3, (C,), dtype=jnp.float32) * 0.02

    ref = conv_lr_reference(fea, conv_weight, conv_bias)

    # Default path: bf16 MXU operands, fp32 accumulation.
    out_bf16 = jax.block_until_ready(conv_lr_forward(fea, conv_weight, conv_bias))
    assert out_bf16.shape == fea.shape
    np.testing.assert_allclose(np.asarray(out_bf16), np.asarray(ref),
                               rtol=3e-2, atol=3e-2)

    # fp32-operand path for tighter numerical validation of the recurrence.
    out_f32 = jax.block_until_ready(
        conv_lr_forward(fea, conv_weight, conv_bias, matmul_dtype=None))
    np.testing.assert_allclose(np.asarray(out_f32), np.asarray(ref),
                               rtol=1e-2, atol=1e-2)

    print("KERNEL_OK")
</pallas_src>

<mosaic_0001>
module attributes {stable_mosaic.version = 11 : i64} {
  func.func @_sweep_kernel(%arg0: i32, %arg1: i32, %arg2: memref<1x8x128xf32, #tpu.memory_space<vmem>>, %arg3: memref<128x128xbf16, #tpu.memory_space<vmem>>, %arg4: memref<1x128xf32, #tpu.memory_space<vmem>>, %arg5: memref<1x8x128xf32, #tpu.memory_space<vmem>>, %arg6: memref<8x128xf32, #tpu.memory_space<vmem>>) attributes {dimension_semantics = [#tpu.dimension_semantics<parallel>, #tpu.dimension_semantics<arbitrary>], iteration_bounds = array<i64: 2, 16>, scalar_prefetch = 0 : i64, scratch_operands = 1 : i64, tpu.core_type = #tpu.core_type<tc>, window_params = [{transform_indices = @transform_0, window_bounds = array<i64: 1, 8, 128>}, {pipeline_mode = #tpu.pipeline_mode<synchronous>, transform_indices = @transform_1, window_bounds = array<i64: 128, 128>}, {pipeline_mode = #tpu.pipeline_mode<synchronous>, transform_indices = @transform_2, window_bounds = array<i64: 1, 128>}, {transform_indices = @transform_3, window_bounds = array<i64: 1, 8, 128>}]} {
    %c0 = arith.constant 0 : index
    %c0_0 = arith.constant 0 : index
    %c0_1 = arith.constant 0 : index
    %0 = vector.load %arg2[%c0, %c0_0, %c0_1] : memref<1x8x128xf32, #tpu.memory_space<vmem>>, vector<1x8x128xf32>
    %1 = vector.shape_cast %0 : vector<1x8x128xf32> to vector<8x128xf32>
    %c0_i32 = arith.constant 0 : i32
    %2 = arith.cmpi eq, %arg1, %c0_i32 : i32
    %3 = arith.extui %2 : i1 to i32
    %c0_i32_2 = arith.constant 0 : i32
    %4 = arith.cmpi ne, %3, %c0_i32_2 : i32
    scf.if %4 {
      %c0_10 = arith.constant 0 : index
      %c0_11 = arith.constant 0 : index
      %12 = vector.load %arg6[%c0_10, %c0_11] : memref<8x128xf32, #tpu.memory_space<vmem>>, vector<8x128xf32>
      tpu.vector_store %arg6[%c0_10, %c0_11], %1 {strides = array<i32>} : memref<8x128xf32, #tpu.memory_space<vmem>>, vector<8x128xf32>,
    } else {
    }
    %c0_i32_3 = arith.constant 0 : i32
    %5 = arith.cmpi sgt, %arg1, %c0_i32_3 : i32
    %6 = arith.extui %5 : i1 to i32
    %c0_i32_4 = arith.constant 0 : i32
    %7 = arith.cmpi ne, %6, %c0_i32_4 : i32
    scf.if %7 {
      %c0_10 = arith.constant 0 : index
      %c0_11 = arith.constant 0 : index
      %12 = vector.load %arg6[%c0_10, %c0_11] : memref<8x128xf32, #tpu.memory_space<vmem>>, vector<8x128xf32>
      %13 = arith.truncf %12 : vector<8x128xf32> to vector<8x128xbf16>
      %c0_12 = arith.constant 0 : index
      %c0_13 = arith.constant 0 : index
      %14 = vector.load %arg3[%c0_12, %c0_13] : memref<128x128xbf16, #tpu.memory_space<vmem>>, vector<128x128xbf16>
      %cst = arith.constant dense<0.000000e+00> : vector<8x128xf32>
      %15 = tpu.matmul %13, %14, %cst {dimension_numbers = #tpu.dot_dimension_numbers<[1], [0], [0], [1], [0, 0, 1, 1], [], []>} : vector<8x128xbf16>, vector<128x128xbf16>, vector<8x128xf32> -> vector<8x128xf32>
      %c0_14 = arith.constant 0 : index
      %c0_15 = arith.constant 0 : index
      %16 = vector.load %arg4[%c0_14, %c0_15] : memref<1x128xf32, #tpu.memory_space<vmem>>, vector<1x128xf32>
      %17 = vector.broadcast %16 : vector<1x128xf32> to vector<8x128xf32>
      %18 = arith.addf %15, %17 : vector<8x128xf32>
      %cst_16 = arith.constant 0.000000e+00 : f32
      %19 = vector.broadcast %cst_16 : f32 to vector<8x128xf32>
      %20 = arith.maximumf %18, %19 : vector<8x128xf32>
      %21 = arith.addf %20, %1 : vector<8x128xf32>
      %c0_17 = arith.constant 0 : index
      %c0_18 = arith.constant 0 : index
      %22 = vector.load %arg6[%c0_17, %c0_18] : memref<8x128xf32, #tpu.memory_space<vmem>>, vector<8x128xf32>
      tpu.vector_store %arg6[%c0_17, %c0_18], %21 {strides = array<i32>} : memref<8x128xf32, #tpu.memory_space<vmem>>, vector<8x128xf32>,
    } else {
    }
    %c0_5 = arith.constant 0 : index
    %c0_6 = arith.constant 0 : index
    %8 = vector.load %arg6[%c0_5, %c0_6] : memref<8x128xf32, #tpu.memory_space<vmem>>, vector<8x128xf32>
    %c0_7 = arith.constant 0 : index
    %c0_8 = arith.constant 0 : index
    %c0_9 = arith.constant 0 : index
    %9 = vector.load %arg5[%c0_7, %c0_8, %c0_9] : memref<1x8x128xf32, #tpu.memory_space<vmem>>, vector<1x8x128xf32>
    %10 = vector.shape_cast %9 : vector<1x8x128xf32> to vector<8x128xf32>
    %11 = vector.shape_cast %8 : vector<8x128xf32> to vector<1x8x128xf32>
    tpu.vector_store %arg5[%c0_7, %c0_8, %c0_9], %11 {strides = array<i32>} : memref<1x8x128xf32, #tpu.memory_space<vmem>>, vector<1x8x128xf32>,
    return
  }
  func.func @transform_0(%arg0: i32, %arg1: i32) -> (i32, i32, i32) {
    %c0_i32 = arith.constant 0 : i32
    %c0_i32_0 = arith.constant 0 : i32
    return %arg1, %arg0, %c0_i32 : i32, i32, i32
  }
  func.func @transform_1(%arg0: i32, %arg1: i32) -> (i32, i32) {
    %c0_i32 = arith.constant 0 : i32
    %c0_i32_0 = arith.constant 0 : i32
    %c0_i32_1 = arith.constant 0 : i32
    return %c0_i32, %c0_i32_0 : i32, i32
  }
  func.func @transform_2(%arg0: i32, %arg1: i32) -> (i32, i32) {
    %c0_i32 = arith.constant 0 : i32
    %c0_i32_0 = arith.constant 0 : i32
    %c0_i32_1 = arith.constant 0 : i32
    return %c0_i32, %c0_i32_0 : i32, i32
  }
  func.func @transform_3(%arg0: i32, %arg1: i32) -> (i32, i32, i32) {
    %c0_i32 = arith.constant 0 : i32
    %c0_i32_0 = arith.constant 0 : i32
    return %arg1, %arg0, %c0_i32 : i32, i32, i32
  }
}

</mosaic_0001>

<llo_original>
// kernel: tpu_custom_call.1
$region0: #{tpu_custom_call.1}
  #allocation0 [shape = 'u32[]', space=smem, size = 0x4, offset = 0x4, fixed_abs, tag = 'smem constant byte address 0x4 - core index']
  #allocation1 [shape = 'u32[144,128]{1,0:T(1,128)}', space=vmem, size = 0x12000, scoped, tag = 'internal scratch']
  #allocation2 [shape = 'f32[8,128]{1,0:T(8,128)}', space=vmem, size = 0x1000, scoped, tag = 'scratch operand']
  %s0 = inlined_call_operand.hbm [shape: f32[16,16,128], index: 0, kind: input, shape index: {}]
  %s1 = inlined_call_operand.hbm [shape: bf16[128,128], index: 1, kind: input, shape index: {}]
  %s2 = inlined_call_operand.vmem [shape: f32[1,128], index: 2, kind: input, shape index: {}]
  %s3 = inlined_call_operand.hbm [shape: f32[16,16,128], index: 3, kind: output, shape index: {}]
  %s4 = sld [smem:[#allocation0]]
  $region61: #{tpu_custom_call.1} parent=0
    _
  %s6 = ssub.s32 1, %s4
  %s7 = scalar_select 0, %s6, %s4
  $region1: #{tpu_custom_call.1} parent=0
    #allocation3 [shape = 'u8[8192]{0}', space=vmem, size = 0x2000, scoped, tag = 'input window, operand 0']
    #allocation4 [shape = 's32[2]{0}', space=sflag, size = 0x8, scoped, tag = 'scoped memory for tpu_custom_call.1']
    #allocation5 [shape = 's32[2]{0}', space=sflag, size = 0x8, scoped, tag = 'scoped memory for tpu_custom_call.1']
    #allocation6 [shape = 'u8[32768]{0}', space=vmem, size = 0x8000, scoped, tag = 'input window, operand 1, single buffered']
    #allocation7 [shape = 's32[1]{0}', space=sflag, size = 0x4, scoped, tag = 'scoped memory for tpu_custom_call.1']
    #allocation8 [shape = 'u8[8192]{0}', space=vmem, size = 0x2000, scoped, tag = 'output window, operand 0']
    %8 = vsyncpa [#allocation4], 0
    %s9 = scalar_lea.sflag [#allocation4], 1
    %10 = vsyncpa %s9, 0
    %11 = vsyncpa [#allocation7], 0
    %12 = vsyncpa [#allocation5], 0
    %s13 = scalar_lea.sflag [#allocation5], 1
    %14 = vsyncpa %s13, 0
    loop: start=0, step=1, limit=34
    $region2: #{tpu_custom_call.1} parent=1 // loop_pre_header
      _
    $region3: #{tpu_custom_call.1} parent=1 // loop_header
      %s16 = sphi 0, %s20
      %p17 = scmp.ge.s32.totalorder %s16, 34
      %s23 = sphi 0, %s35
      %s24 = sphi 0, %s31
      %s25 = sphi 0, %s23
      %s26 = sphi 0, %s24
      %s27 = sphi 0, %s25
      %s28 = sphi 0, %s26
      %s40 = sphi 0, %s42
      %s43 = sphi 0, %s40
      %s44 = sphi 0, %s43
      %s60 = sphi 0, %s44
      %s64 = sphi 0, %s64
      %s66 = sphi 0, %s64
      %s67 = sphi 0, %s66
      %s81 = sphi 0, %s67
      %s85 = sphi 0, %s85
      %s87 = sphi 0, %s85
      %s88 = sphi 0, %s87
      %s102 = sphi 0, %s88
      %s110 = sphi 0, %s112
      %s113 = sphi 0, %s110
      %s114 = sphi 0, %s113
      %s130 = sphi 0, %s114
    $region4: #{tpu_custom_call.1} parent=1 // loop_header_branch
      %19 = sbr.rel (%p17) target = $region8
    $region5: #{tpu_custom_call.1} parent=1 // loop_body
      %s21 = ssub.s32 %s16, 1
      %s22 = ssub.s32 %s16, 2
      %s29 = sadd.s32 1, %s24
      %p30 = scmp.ge.s32.totalorder %s29, 16
      %s31 = scalar_select %p30, 0, %s29
      %s32 = sadd.s32 1, %s23
      %s33 = scalar_select %p30, %s32, %s23
      %p34 = scmp.ge.s32.totalorder %s33, 2
      %s35 = scalar_select %p34, 0, %s33
      %s36 = ssub.s32 %s24, %s31
      %s37 = ssub.s32 %s23, %s35
      %s38 = sor.u32 %s36, %s37
      %p39 = scmp.eq.s32.totalorder %s38, 0
      %s41 = sadd.s32 %s40, 1
      %s42 = scalar_select %p39, %s40, %s41
      %p45 = pneg %p39
      %p46 = scmp.eq.s32.totalorder %s16, 31
      %p47 = por %p45, %p46
      %p48 = scmp.ne.s32.totalorder %s40, %s43
      %p49 = scmp.eq.s32.totalorder %s16, 0
      %p50 = por %p48, %p49
      %p51 = scmp.ne.s32.totalorder %s40, %s43
      %p52 = scmp.eq.s32.totalorder %s21, 31
      %p53 = por %p51, %p52
      %p54 = scmp.ne.s32.totalorder %s43, %s44
      %p55 = scmp.eq.s32.totalorder %s21, 0
      %p56 = por %p54, %p55
      %p57 = scmp.ne.s32.totalorder %s43, %s44
      %p58 = scmp.eq.s32.totalorder %s22, 31
      %p59 = por %p57, %p58
      %p61 = scmp.ne.s32.totalorder %s44, %s60
      %p62 = scmp.eq.s32.totalorder %s22, 0
      %p63 = por %p61, %p62
      %s65 = sadd.s32 %s64, 1
      %p68 = scmp.eq.s32.totalorder %s16, 31
      %p69 = scmp.ne.s32.totalorder %s64, %s66
      %p70 = scmp.eq.s32.totalorder %s16, 0
      %p71 = por %p69, %p70
      %p72 = scmp.ne.s32.totalorder %s64, %s66
      %p73 = scmp.eq.s32.totalorder %s21, 31
      %p74 = por %p72, %p73
      %p75 = scmp.ne.s32.totalorder %s66, %s67
      %p76 = scmp.eq.s32.totalorder %s21, 0
      %p77 = por %p75, %p76
      %p78 = scmp.ne.s32.totalorder %s66, %s67
      %p79 = scmp.eq.s32.totalorder %s22, 31
      %p80 = por %p78, %p79
      %p82 = scmp.ne.s32.totalorder %s67, %s81
      %p83 = scmp.eq.s32.totalorder %s22, 0
      %p84 = por %p82, %p83
      %s86 = sadd.s32 %s85, 1
      %p89 = scmp.eq.s32.totalorder %s16, 31
      %p90 = scmp.ne.s32.totalorder %s85, %s87
      %p91 = scmp.eq.s32.totalorder %s16, 0
      %p92 = por %p90, %p91
      %p93 = scmp.ne.s32.totalorder %s85, %s87
      %p94 = scmp.eq.s32.totalorder %s21, 31
      %p95 = por %p93, %p94
      %p96 = scmp.ne.s32.totalorder %s87, %s88
      %p97 = scmp.eq.s32.totalorder %s21, 0
      %p98 = por %p96, %p97
      %p99 = scmp.ne.s32.totalorder %s87, %s88
      %p100 = scmp.eq.s32.totalorder %s22, 31
      %p101 = por %p99, %p100
      %p103 = scmp.ne.s32.totalorder %s88, %s102
      %p104 = scmp.eq.s32.totalorder %s22, 0
      %p105 = por %p103, %p104
      %s106 = ssub.s32 %s24, %s31
      %s107 = ssub.s32 %s23, %s35
      %s108 = sor.u32 %s106, %s107
      %p109 = scmp.eq.s32.totalorder %s108, 0
      %s111 = sadd.s32 %s110, 1
      %s112 = scalar_select %p109, %s110, %s111
      %p115 = pneg %p109
      %p116 = scmp.eq.s32.totalorder %s16, 31
      %p117 = por %p115, %p116
      %p118 = scmp.ne.s32.totalorder %s110, %s113
      %p119 = scmp.eq.s32.totalorder %s16, 0
      %p120 = por %p118, %p119
      %p121 = scmp.ne.s32.totalorder %s110, %s113
      %p122 = scmp.eq.s32.totalorder %s21, 31
      %p123 = por %p121, %p122
      %p124 = scmp.ne.s32.totalorder %s113, %s114
      %p125 = scmp.eq.s32.totalorder %s21, 0
      %p126 = por %p124, %p125
      %p127 = scmp.ne.s32.totalorder %s113, %s114
      %p128 = scmp.eq.s32.totalorder %s22, 31
      %p129 = por %p127, %p128
      %p131 = scmp.ne.s32.totalorder %s114, %s130
      %p132 = scmp.eq.s32.totalorder %s22, 0
      %p133 = por %p131, %p132
      %p134 = scmp.le.s32.totalorder 1, %s16
      %p135 = scmp.lt.s32.totalorder %s16, 33
      %p136 = pnand %p134, %p135
      %p137 = pneg %p136
      // Predicated region
      $region9: #{tpu_custom_call.1} parent=5 // pred_check
        _
      $region10: #{tpu_custom_call.1} parent=5 // pred_check_branch
        %139 = sbr.rel (%p136) target = $region12
      $region11: #{tpu_custom_call.1} parent=5 // pred_region
        %s140 = ssub.s32 %s16, 1
        // Predicated region
        $region13: #{tpu_custom_call.1} parent=11 // pred_check
          %p141 = pneg %p77
        $region14: #{tpu_custom_call.1} parent=11 // pred_check_branch
          %143 = sbr.rel (%p141) target = $region16
        $region15: #{tpu_custom_call.1} parent=11 // pred_region
          %s145 = ssub.s32 1024, 1024
          %146 = vsyncadd [#allocation7], %s145
          %s147 = sshll.u32 [#allocation6], 4
          %s148 = int_to_ptr.vmem [resolvable:$true] %s147
          %153 = dma.hbm_to_vmem [thread:$0]  %s1, 1024, %s148, [#allocation7], 64, 64, 4
        $region16: #{tpu_custom_call.1} parent=11 // pred_fallthru
          _
        // Predicated region
        $region17: #{tpu_custom_call.1} parent=11 // pred_check
          %p154 = pneg %p98
        $region18: #{tpu_custom_call.1} parent=11 // pred_check_branch
          %156 = sbr.rel (%p154) target = $region20
        $region19: #{tpu_custom_call.1} parent=11 // pred_region
          _
        $region20: #{tpu_custom_call.1} parent=11 // pred_fallthru
          _
      $region12: #{tpu_custom_call.1} parent=5 // pred_fallthru
        _
      %p157 = scmp.lt.s32.totalorder %s16, 32
      // Predicated region
      $region21: #{tpu_custom_call.1} parent=5 // pred_check
        %p158 = pneg %p157
      $region22: #{tpu_custom_call.1} parent=5 // pred_check_branch
        %160 = sbr.rel (%p158) target = $region24
      $region23: #{tpu_custom_call.1} parent=5 // pred_region
        // Predicated region
        $region25: #{tpu_custom_call.1} parent=23 // pred_check
          %p161 = pneg %p50
        $region26: #{tpu_custom_call.1} parent=23 // pred_check_branch
          %163 = sbr.rel (%p161) target = $region28
        $region27: #{tpu_custom_call.1} parent=23 // pred_region
          %s164 = sand.u32 %s40, 1
          %s165 = scalar_lea.sflag [#allocation4], %s164
          %s166 = sand.u32 %s40, 1
          %s167 = smul.addr %s166, 8
          %s168 = scalar_lea.vmem [#allocation3], %s167
          %s170 = ssub.s32 128, 128
          %171 = vsyncadd %s165, %s170
          %s172 = smul.addr %s24, 2
          %s173 = sadd.s32 %s23, %s172
          %s174 = smul.addr %s173, 128
          %s175 = scalar_lea.hbm %s0, %s174
          %s177 = sshll.u32 %s168, 4
          %s178 = int_to_ptr.vmem [resolvable:$true] %s177
          %180 = dma.hbm_to_vmem [thread:$0]  %s175, 128, %s178, %s165
        $region28: #{tpu_custom_call.1} parent=23 // pred_fallthru
          _
      $region24: #{tpu_custom_call.1} parent=5 // pred_fallthru
        _
      %p181 = scmp.le.s32.totalorder 1, %s16
      %p182 = scmp.lt.s32.totalorder %s16, 33
      %p183 = pnand %p181, %p182
      %p184 = pneg %p183
      // Predicated region
      $region29: #{tpu_custom_call.1} parent=5 // pred_check
        _
      $region30: #{tpu_custom_call.1} parent=5 // pred_check_branch
        %186 = sbr.rel (%p183) target = $region32
      $region31: #{tpu_custom_call.1} parent=5 // pred_region
        %s187 = ssub.s32 %s16, 1
        %s188 = sand.u32 %s43, 1
        %s189 = scalar_lea.sflag [#allocation4], %s188
        %s190 = sand.u32 %s43, 1
        %s191 = smul.addr %s190, 8
        %s192 = scalar_lea.vmem [#allocation3], %s191
        // Predicated region
        $region33: #{tpu_custom_call.1} parent=31 // pred_check
          %p193 = pneg %p56
        $region34: #{tpu_custom_call.1} parent=31 // pred_check_branch
          %195 = sbr.rel (%p193) target = $region36
        $region35: #{tpu_custom_call.1} parent=31 // pred_region
          %196 = dma.done %s189, 128
        $region36: #{tpu_custom_call.1} parent=31 // pred_fallthru
          _
        // Predicated region
        $region37: #{tpu_custom_call.1} parent=31 // pred_check
          %p197 = pneg %p77
        $region38: #{tpu_custom_call.1} parent=31 // pred_check_branch
          %199 = sbr.rel (%p197) target = $region40
        $region39: #{tpu_custom_call.1} parent=31 // pred_region
          %200 = dma.done [#allocation7], 1024
        $region40: #{tpu_custom_call.1} parent=31 // pred_fallthru
          _
        %s201 = sand.u32 %s43, 1
        %s202 = scalar_lea.sflag [#allocation4], %s201
        %s203 = sand.u32 %s43, 1
        %s204 = smul.addr %s203, 8
        %s205 = scalar_lea.vmem [#allocation3], %s204
        %p206 = pneg %p56
        %p207 = pneg %p53
        %p208 = pneg %p77
        %p209 = pneg %p74
        %p210 = pneg %p98
        %p211 = pneg %p95
        %p212 = pneg %p126
        %p213 = pneg %p123
        %s214 = sand.u32 %s113, 1
        %s215 = scalar_lea.sflag [#allocation5], %s214
        %s216 = sand.u32 %s113, 1
        %s217 = smul.addr %s216, 8
        %s218 = scalar_lea.vmem [#allocation8], %s217
        %v220 = vld [vmem:[%s192] sm:$0xff]
        %p221 = scmp.eq.s32.totalorder %s26, 0
        // Predicated region
        $region41: #{tpu_custom_call.1} parent=31 // pred_check
          %p222 = pneg %p221
        $region42: #{tpu_custom_call.1} parent=31 // pred_check_branch
          %224 = sbr.rel (%p222) target = $region44
        $region43: #{tpu_custom_call.1} parent=31 // pred_region
          %225 = vst [vmem:[#allocation2] sm:$0xff] %v220
        $region44: #{tpu_custom_call.1} parent=31 // pred_fallthru
          _
        %p226 = scmp.gt.s32.totalorder %s26, 0
        // Predicated region
        $region45: #{tpu_custom_call.1} parent=31 // pred_check
          %p227 = pneg %p226
        $region46: #{tpu_custom_call.1} parent=31 // pred_check_branch
          %229 = sbr.rel (%p227) target = $region48
        $region47: #{tpu_custom_call.1} parent=31 // pred_region
          %v230 = vld [vmem:[#allocation2] sm:$0xff]
          %v231 = vpack.c.bf16 %v230, %v230
          %v232 = vld [vmem:[#allocation6] sm:$0xf]
          %v233 = vld [vmem:[#allocation6 + $0x4] sm:$0xf]
          %v234 = vld [vmem:[#allocation6 + $0x8] sm:$0xf]
          %v235 = vld [vmem:[#allocation6 + $0xc] sm:$0xf]
          %v236 = vld [vmem:[#allocation6 + $0x10] sm:$0xf]
          %v237 = vld [vmem:[#allocation6 + $0x14] sm:$0xf]
          %v238 = vld [vmem:[#allocation6 + $0x18] sm:$0xf]
          %v239 = vld [vmem:[#allocation6 + $0x1c] sm:$0xf]
          %v240 = vld [vmem:[#allocation6 + $0x20] sm:$0xf]
          %v241 = vld [vmem:[#allocation6 + $0x24] sm:$0xf]
          %v242 = vld [vmem:[#allocation6 + $0x28] sm:$0xf]
          %v243 = vld [vmem:[#allocation6 + $0x2c] sm:$0xf]
          %v244 = vld [vmem:[#allocation6 + $0x30] sm:$0xf]
          %v245 = vld [vmem:[#allocation6 + $0x34] sm:$0xf]
          %v246 = vld [vmem:[#allocation6 + $0x38] sm:$0xf]
          %v247 = vld [vmem:[#allocation6 + $0x3c] sm:$0xf]
          %v248 = vld [vmem:[%s2] sm:$0x1]
          %v250 = vlaneseq
          %v251 = vshrl.u32 %v250, 7
          %v252 = vsub.s32 0, %v251
          %v253 = vrot.slane %v248, %v252
          %v271 = vunpack.c.l.b16 %v232
          %v272 = vunpack.c.l.b16 %v233
          %v273 = vunpack.c.l.b16 %v234
          %v274 = vunpack.c.l.b16 %v235
          %v275 = vunpack.c.l.b16 %v236
          %v276 = vunpack.c.l.b16 %v237
          %v277 = vunpack.c.l.b16 %v238
          %v278 = vunpack.c.l.b16 %v239
          %v279 = vunpack.c.l.b16 %v240
          %v280 = vunpack.c.l.b16 %v241
          %v281 = vunpack.c.l.b16 %v242
          %v282 = vunpack.c.l.b16 %v243
          %v283 = vunpack.c.l.b16 %v244
          %v284 = vunpack.c.l.b16 %v245
          %v285 = vunpack.c.l.b16 %v246
          %v286 = vunpack.c.l.b16 %v247
          %v287 = vpack.c.b16 %v272, %v271
          %v288 = vpack.c.b16 %v274, %v273
          %v289 = vpack.c.b16 %v276, %v275
          %v290 = vpack.c.b16 %v278, %v277
          %v291 = vpack.c.b16 %v280, %v279
          %v292 = vpack.c.b16 %v282, %v281
          %v293 = vpack.c.b16 %v284, %v283
          %v294 = vpack.c.b16 %v286, %v285
          %303 = vmatprep.subr.bf16.mxu0 0
          %304 = vmatpush1.bf16.msra.mxu0 %v287
          %305 = vmatprep.subr.bf16.mxu0 0
          %306 = vmatpush1.bf16.msra.mxu0 %v288
          %307 = vmatprep.subr.bf16.mxu0 0
          %308 = vmatpush1.bf16.msra.mxu0 %v289
          %309 = vmatprep.subr.bf16.mxu0 0
          %310 = vmatpush1.bf16.msra.mxu0 %v290
          %311 = vmatprep.subr.bf16.mxu0 0
          %312 = vmatpush1.bf16.msra.mxu0 %v291
          %313 = vmatprep.subr.bf16.mxu0 0
          %314 = vmatpush1.bf16.msra.mxu0 %v292
          %315 = vmatprep.subr.bf16.mxu0 0
          %316 = vmatpush1.bf16.msra.mxu0 %v293
          %317 = vmatprep.subr.bf16.mxu0 0
          %318 = vmatpush1.bf16.msra.mxu0 %v294
          %319 = vmatprep.subr.bf16.mxu0 0
          %320 = vmatpush1.bf16.msra.mxu0 0
          %321 = vmatprep.subr.bf16.mxu0 0
          %322 = vmatpush1.bf16.msra.mxu0 0
          %323 = vmatprep.subr.bf16.mxu0 0
          %324 = vmatpush1.bf16.msra.mxu0 0
          %325 = vmatprep.subr.bf16.mxu0 0
          %326 = vmatpush1.bf16.msra.mxu0 0
          %327 = vmatprep.subr.bf16.mxu0 0
          %328 = vmatpush1.bf16.msra.mxu0 0
          %329 = vmatprep.subr.bf16.mxu0 0
          %330 = vmatpush1.bf16.msra.mxu0 0
          %331 = vmatprep.subr.bf16.mxu0 0
          %332 = vmatpush1.bf16.msra.mxu0 0
          %333 = vmatprep.subr.bf16.mxu0 0
          %334 = vmatpush1.bf16.msra.mxu0 0
          %335 = vmatprep.mubr.bf16.mxu0 0
          %336 = vmatmul.mubr.bf16.gmra.mrb[0].mxu0 %v231
          %v337 = vpop.f32.mrb[0].mxu0
          %v338 = vadd.f32 %v253, %v337
          %v339 = vpop.f32.mrb[0].mxu0
          %v340 = vpop.f32.mrb[0].mxu0
          %v341 = vpop.f32.mrb[0].mxu0
          %342 = vdwg.mxu0
          %v343 = vmax.f32 %v338, 0.0
          %v344 = vadd.f32 %v343, %v220
          %345 = vst [vmem:[#allocation2] sm:$0xff] %v344
        $region48: #{tpu_custom_call.1} parent=31 // pred_fallthru
          _
        %v346 = vld [vmem:[#allocation2] sm:$0xff]
        %347 = vst [vmem:[%s218] sm:$0xff] %v346
        %s348 = sand.u32 %s113, 1
        %s349 = scalar_lea.sflag [#allocation5], %s348
        %s350 = sand.u32 %s113, 1
        %s351 = smul.addr %s350, 8
        %s352 = scalar_lea.vmem [#allocation8], %s351
        // Predicated region
        $region49: #{tpu_custom_call.1} parent=31 // pred_check
          %p353 = pneg %p123
        $region50: #{tpu_custom_call.1} parent=31 // pred_check_branch
          %355 = sbr.rel (%p353) target = $region52
        $region51: #{tpu_custom_call.1} parent=31 // pred_region
          %s357 = ssub.s32 128, 128
          %358 = vsyncadd %s349, %s357
          %s359 = smul.addr %s26, 2
          %s360 = sadd.s32 %s25, %s359
          %s361 = smul.addr %s360, 128
          %s362 = scalar_lea.hbm %s3, %s361
          %s364 = sshll.u32 %s352, 4
          %s365 = int_to_ptr.vmem [resolvable:$true] %s364
          %367 = dma.vmem_to_hbm [thread:$0]  %s365, 128, %s362, %s349
        $region52: #{tpu_custom_call.1} parent=31 // pred_fallthru
          _
      $region32: #{tpu_custom_call.1} parent=5 // pred_fallthru
        _
      %p368 = scmp.le.s32.totalorder 2, %s16
      // Predicated region
      $region53: #{tpu_custom_call.1} parent=5 // pred_check
        %p369 = pneg %p368
      $region54: #{tpu_custom_call.1} parent=5 // pred_check_branch
        %371 = sbr.rel (%p369) target = $region56
      $region55: #{tpu_custom_call.1} parent=5 // pred_region
        %s372 = ssub.s32 %s16, 2
        // Predicated region
        $region57: #{tpu_custom_call.1} parent=55 // pred_check
          %p373 = pneg %p129
        $region58: #{tpu_custom_call.1} parent=55 // pred_check_branch
          %375 = sbr.rel (%p373) target = $region60
        $region59: #{tpu_custom_call.1} parent=55 // pred_region
          %s376 = sand.u32 %s114, 1
          %s377 = scalar_lea.sflag [#allocation5], %s376
          %s378 = sand.u32 %s114, 1
          %s379 = smul.addr %s378, 8
          %s380 = scalar_lea.vmem [#allocation8], %s379
          %381 = dma.done %s377, 128
        $region60: #{tpu_custom_call.1} parent=55 // pred_fallthru
          _
      $region56: #{tpu_custom_call.1} parent=5 // pred_fallthru
        _
    $region6: #{tpu_custom_call.1} parent=1 // loop_footer
      %s20 = sadd.s32 1, %s16
    $region7: #{tpu_custom_call.1} parent=1 // loop_footer_branch
      %15 = sbr.rel target = $region3
    $region8: #{tpu_custom_call.1} parent=1 // loop_exit
      _
    %382 = vsyncpa [#allocation4], 1
    %s383 = scalar_lea.sflag [#allocation4], 1
    %384 = vsyncpa %s383, 1
    %385 = vsyncpa [#allocation7], 1
    %386 = vsyncpa [#allocation5], 1
    %s387 = scalar_lea.sflag [#allocation5], 1
    %388 = vsyncpa %s387, 1

</llo_original>
